<compile_context>
chip_gen: v6e
topology: v6e:2x2x1
jax: 0.10.0
libtpu: 0.0.40
codegen_flags: <defaults>
</compile_context>

<pallas_src>
import functools

import jax
import jax.numpy as jnp
from jax.experimental import pallas as pl
from jax.experimental.pallas import tpu as pltpu

LANE = 128           # TPU vreg lane width; pad all feature dims to this.
SUBLANE_GRAN = 16    # bf16 activations: min tile is (16, 128); also fine for f32.
MAX_TILE_B = 1024    # cap on rows per grid step (per-tile VMEM stays ~1-2 MiB).


def _round_up(x, m):
    return ((x + m - 1) // m) * m


def _mlp_kernel(x_ref,
                w1_ref, b1_ref,
                w2_ref, b2_ref,
                w3_ref, b3_ref,
                w4_ref, b4_ref,
                w5_ref, b5_ref,
                o_ref):
    """Fused 5-layer MLP on one (tile_b, 128) activation tile.

    x is already streamed in the MXU operand dtype (bf16 by default), so no
    per-tile cast is needed for layer 1. Accumulation and all elementwise work
    (bias add, ReLU) are f32.
    """
    compute_dtype = w1_ref.dtype

    # Layer 1: Linear + ReLU (x already in compute dtype).
    h = jnp.dot(x_ref[...], w1_ref[...], preferred_element_type=jnp.float32)
    h = jnp.maximum(h + b1_ref[...], 0.0)

    # Hidden layers 2..4: Linear + ReLU (unrolled at trace time).
    for w_ref, b_ref in ((w2_ref, b2_ref), (w3_ref, b3_ref), (w4_ref, b4_ref)):
        h = jnp.dot(h.astype(compute_dtype), w_ref[...],
                    preferred_element_type=jnp.float32)
        h = jnp.maximum(h + b_ref[...], 0.0)

    # Output layer: Linear (no activation), lane-dense full-width store.
    out = jnp.dot(h.astype(compute_dtype), w5_ref[...],
                  preferred_element_type=jnp.float32)
    o_ref[...] = (out + b5_ref[...]).astype(o_ref.dtype)


def prepare_params(params, compute_dtype=jnp.bfloat16):
    """One-time parameter preparation (do NOT call per forward pass).

    params: list of (W, b) with W shaped (out_features, in_features) like
    torch.nn.Linear. Returns a flat list [W1p, b1p, ..., W5p, b5p] where
      Wp: (in_pad, out_pad) in `compute_dtype` (bf16 default: native MXU
          operand dtype on v5e/v6e/v7x), zero-padded, pre-transposed.
      bp: (1, out_pad) in float32 (elementwise work stays f32).
    Zero padding + ReLU(0)=0 keeps the valid region exact; the wrapper slices
    the real output columns back out.
    """
    prepped = []
    for w, b in params:
        w = jnp.asarray(w, jnp.float32).T                     # (in, out)
        fan_in, fan_out = w.shape
        in_pad = _round_up(fan_in, LANE)
        out_pad = _round_up(fan_out, LANE)
        w_p = jnp.pad(w, ((0, in_pad - fan_in), (0, out_pad - fan_out)))
        b_p = jnp.pad(jnp.asarray(b, jnp.float32).reshape(1, -1),
                      ((0, 0), (0, out_pad - fan_out)))
        prepped.append(w_p.astype(compute_dtype))
        prepped.append(b_p)
    return prepped


def _choose_batch_tiling(batch, max_tile_b):
    """Pick (tile_b, batch_pad, n_steps): 16-row granule, bounded padding,
    >= 2 grid steps whenever the batch spans more than one minimum tile so the
    'parallel' grid axis can split across v7x's two TensorCores."""
    b_gran = _round_up(batch, SUBLANE_GRAN)
    n_steps = pl.cdiv(b_gran, max_tile_b)
    if b_gran >= 2 * SUBLANE_GRAN:
        n_steps = max(n_steps, 2)
    tile_b = _round_up(pl.cdiv(b_gran, n_steps), SUBLANE_GRAN)
    batch_pad = n_steps * tile_b
    return tile_b, batch_pad, n_steps


@functools.partial(jax.jit, static_argnames=("out_dim", "max_tile_b"))
def mlp_forward(x, prepped, out_dim, max_tile_b=MAX_TILE_B):
    """Run the fused MLP kernel. `prepped` comes from prepare_params()."""
    batch, in_dim = x.shape
    compute_dtype = prepped[0].dtype
    in_pad, hid_pad = prepped[0].shape
    out_pad = prepped[-1].shape[1]

    tile_b, batch_pad, n_steps = _choose_batch_tiling(batch, max_tile_b)
    grid = (n_steps,)

    # Per-call glue: one fused cast+pad of x into the streamed operand dtype.
    x_pad = jnp.pad(x.astype(compute_dtype),
                    ((0, batch_pad - batch), (0, in_pad - in_dim)))

    # x / output march over the batch; weights & biases stay VMEM-resident.
    resident = lambda i: (0, 0)
    in_specs = [pl.BlockSpec((tile_b, in_pad), lambda i: (i, 0))]
    # Constant-index blocks don't need double buffering: Buffered(1) halves
    # their VMEM footprint (important headroom on v7x's smaller VMEM).
    in_specs += [pl.BlockSpec(a.shape, resident, pipeline_mode=pl.Buffered(1))
                 for a in prepped]
    out_specs = pl.BlockSpec((tile_b, out_pad), lambda i: (i, 0))

    flops = 2 * batch_pad * (in_pad * hid_pad
                             + 3 * hid_pad * hid_pad
                             + hid_pad * out_pad)
    bytes_accessed = (x_pad.size * x_pad.dtype.itemsize
                      + sum(a.size * a.dtype.itemsize for a in prepped)
                      + batch_pad * out_pad * 4)
    cost = pl.CostEstimate(flops=flops, transcendentals=0,
                           bytes_accessed=bytes_accessed)

    out_padded = pl.pallas_call(
        _mlp_kernel,
        out_shape=jax.ShapeDtypeStruct((batch_pad, out_pad), jnp.float32),
        grid=grid,
        in_specs=in_specs,
        out_specs=out_specs,
        compiler_params=pltpu.CompilerParams(
            dimension_semantics=("parallel",)),
        cost_estimate=cost,
    )(x_pad, *prepped)

    # TODO(synk): for hidden dims >= ~1024 the resident-weight assumption stops
    # fitting v7x's 64 MiB VMEM; a K/N-tiled grid with an f32 accumulator would
    # be needed there (irrelevant at these sizes).
    return out_padded[:batch, :out_dim]


def init_params(key, input_dim, hidden_dim, output_dim, num_hidden_layers=3):
    """Deterministic init mimicking torch.nn.Linear default (uniform +-1/sqrt(fan_in))."""
    dims = [input_dim] + [hidden_dim] * (num_hidden_layers + 1) + [output_dim]
    params = []
    for i in range(len(dims) - 1):
        fan_in, fan_out = dims[i], dims[i + 1]
        key, kw, kb = jax.random.split(key, 3)
        bound = 1.0 / jnp.sqrt(fan_in)
        w = jax.random.uniform(kw, (fan_out, fan_in), jnp.float32, -bound, bound)
        b = jax.random.uniform(kb, (fan_out,), jnp.float32, -bound, bound)
        params.append((w, b))
    return params


def reference_forward(x, params):
    h = x
    for i, (w, b) in enumerate(params):
        h = h @ w.T + b
        if i != len(params) - 1:
            h = jnp.maximum(h, 0.0)
    return h


if __name__ == "__main__":
    key = jax.random.PRNGKey(0)
    batch, input_dim, hidden_dim, output_dim = 8, 16, 32, 8

    key, kx = jax.random.split(key)
    x = jax.random.normal(kx, (batch, input_dim), jnp.float32)
    params = init_params(key, input_dim, hidden_dim, output_dim, num_hidden_layers=3)
    ref = reference_forward(x, params)

    # Default path: bf16 MXU operands (right choice on v5e/v6e/v7x), f32 accumulation.
    prepped_bf16 = prepare_params(params)
    out_bf16 = jax.block_until_ready(mlp_forward(x, prepped_bf16, output_dim))
    assert out_bf16.shape == (batch, output_dim)
    assert jnp.allclose(out_bf16, ref, atol=5e-2, rtol=5e-2)

    # f32-operand path kept only for bit-exactness checks vs the reference.
    prepped_f32 = prepare_params(params, compute_dtype=jnp.float32)
    out_f32 = jax.block_until_ready(mlp_forward(x, prepped_f32, output_dim))
    assert out_f32.shape == (batch, output_dim)
    assert jnp.allclose(out_f32, ref, atol=1e-4, rtol=1e-4)

    # Non-aligned batch: exercises bounded batch padding and a >= 2-step grid.
    key, kx2 = jax.random.split(key)
    x2 = jax.random.normal(kx2, (40, input_dim), jnp.float32)
    ref2 = reference_forward(x2, params)
    out2 = jax.block_until_ready(mlp_forward(x2, prepped_bf16, output_dim))
    assert out2.shape == (40, output_dim)
    assert jnp.allclose(out2, ref2, atol=5e-2, rtol=5e-2)

    print("KERNEL_OK")
</pallas_src>

<mosaic_0001>
module attributes {stable_mosaic.version = 11 : i64} {
  func.func @_mlp_kernel(%arg0: i32, %arg1: memref<16x128xbf16, #tpu.memory_space<vmem>>, %arg2: memref<128x128xbf16, #tpu.memory_space<vmem>>, %arg3: memref<1x128xf32, #tpu.memory_space<vmem>>, %arg4: memref<128x128xbf16, #tpu.memory_space<vmem>>, %arg5: memref<1x128xf32, #tpu.memory_space<vmem>>, %arg6: memref<128x128xbf16, #tpu.memory_space<vmem>>, %arg7: memref<1x128xf32, #tpu.memory_space<vmem>>, %arg8: memref<128x128xbf16, #tpu.memory_space<vmem>>, %arg9: memref<1x128xf32, #tpu.memory_space<vmem>>, %arg10: memref<128x128xbf16, #tpu.memory_space<vmem>>, %arg11: memref<1x128xf32, #tpu.memory_space<vmem>>, %arg12: memref<16x128xf32, #tpu.memory_space<vmem>>) attributes {dimension_semantics = [#tpu.dimension_semantics<parallel>], iteration_bounds = array<i64: 1>, scalar_prefetch = 0 : i64, scratch_operands = 0 : i64, tpu.core_type = #tpu.core_type<tc>, window_params = [{transform_indices = @transform_0, window_bounds = array<i64: 16, 128>}, {pipeline_mode = #tpu.pipeline_mode<synchronous>, transform_indices = @transform_1, window_bounds = array<i64: 128, 128>}, {pipeline_mode = #tpu.pipeline_mode<synchronous>, transform_indices = @transform_2, window_bounds = array<i64: 1, 128>}, {pipeline_mode = #tpu.pipeline_mode<synchronous>, transform_indices = @transform_3, window_bounds = array<i64: 128, 128>}, {pipeline_mode = #tpu.pipeline_mode<synchronous>, transform_indices = @transform_4, window_bounds = array<i64: 1, 128>}, {pipeline_mode = #tpu.pipeline_mode<synchronous>, transform_indices = @transform_5, window_bounds = array<i64: 128, 128>}, {pipeline_mode = #tpu.pipeline_mode<synchronous>, transform_indices = @transform_6, window_bounds = array<i64: 1, 128>}, {pipeline_mode = #tpu.pipeline_mode<synchronous>, transform_indices = @transform_7, window_bounds = array<i64: 128, 128>}, {pipeline_mode = #tpu.pipeline_mode<synchronous>, transform_indices = @transform_8, window_bounds = array<i64: 1, 128>}, {pipeline_mode = #tpu.pipeline_mode<synchronous>, transform_indices = @transform_9, window_bounds = array<i64: 128, 128>}, {pipeline_mode = #tpu.pipeline_mode<synchronous>, transform_indices = @transform_10, window_bounds = array<i64: 1, 128>}, {transform_indices = @transform_11, window_bounds = array<i64: 16, 128>}]} {
    %c0 = arith.constant 0 : index
    %c0_0 = arith.constant 0 : index
    %0 = vector.load %arg1[%c0, %c0_0] : memref<16x128xbf16, #tpu.memory_space<vmem>>, vector<16x128xbf16>
    %c0_1 = arith.constant 0 : index
    %c0_2 = arith.constant 0 : index
    %1 = vector.load %arg2[%c0_1, %c0_2] : memref<128x128xbf16, #tpu.memory_space<vmem>>, vector<128x128xbf16>
    %cst = arith.constant dense<0.000000e+00> : vector<16x128xf32>
    %2 = tpu.matmul %0, %1, %cst {dimension_numbers = #tpu.dot_dimension_numbers<[1], [0], [0], [1], [0, 0, 1, 1], [], []>} : vector<16x128xbf16>, vector<128x128xbf16>, vector<16x128xf32> -> vector<16x128xf32>
    %c0_3 = arith.constant 0 : index
    %c0_4 = arith.constant 0 : index
    %3 = vector.load %arg3[%c0_3, %c0_4] : memref<1x128xf32, #tpu.memory_space<vmem>>, vector<1x128xf32>
    %4 = vector.broadcast %3 : vector<1x128xf32> to vector<16x128xf32>
    %5 = arith.addf %2, %4 : vector<16x128xf32>
    %cst_5 = arith.constant 0.000000e+00 : f32
    %6 = vector.broadcast %cst_5 : f32 to vector<16x128xf32>
    %7 = arith.maximumf %5, %6 : vector<16x128xf32>
    %8 = arith.truncf %7 : vector<16x128xf32> to vector<16x128xbf16>
    %c0_6 = arith.constant 0 : index
    %c0_7 = arith.constant 0 : index
    %9 = vector.load %arg4[%c0_6, %c0_7] : memref<128x128xbf16, #tpu.memory_space<vmem>>, vector<128x128xbf16>
    %cst_8 = arith.constant dense<0.000000e+00> : vector<16x128xf32>
    %10 = tpu.matmul %8, %9, %cst_8 {dimension_numbers = #tpu.dot_dimension_numbers<[1], [0], [0], [1], [0, 0, 1, 1], [], []>} : vector<16x128xbf16>, vector<128x128xbf16>, vector<16x128xf32> -> vector<16x128xf32>
    %c0_9 = arith.constant 0 : index
    %c0_10 = arith.constant 0 : index
    %11 = vector.load %arg5[%c0_9, %c0_10] : memref<1x128xf32, #tpu.memory_space<vmem>>, vector<1x128xf32>
    %12 = vector.broadcast %11 : vector<1x128xf32> to vector<16x128xf32>
    %13 = arith.addf %10, %12 : vector<16x128xf32>
    %cst_11 = arith.constant 0.000000e+00 : f32
    %14 = vector.broadcast %cst_11 : f32 to vector<16x128xf32>
    %15 = arith.maximumf %13, %14 : vector<16x128xf32>
    %16 = arith.truncf %15 : vector<16x128xf32> to vector<16x128xbf16>
    %c0_12 = arith.constant 0 : index
    %c0_13 = arith.constant 0 : index
    %17 = vector.load %arg6[%c0_12, %c0_13] : memref<128x128xbf16, #tpu.memory_space<vmem>>, vector<128x128xbf16>
    %cst_14 = arith.constant dense<0.000000e+00> : vector<16x128xf32>
    %18 = tpu.matmul %16, %17, %cst_14 {dimension_numbers = #tpu.dot_dimension_numbers<[1], [0], [0], [1], [0, 0, 1, 1], [], []>} : vector<16x128xbf16>, vector<128x128xbf16>, vector<16x128xf32> -> vector<16x128xf32>
    %c0_15 = arith.constant 0 : index
    %c0_16 = arith.constant 0 : index
    %19 = vector.load %arg7[%c0_15, %c0_16] : memref<1x128xf32, #tpu.memory_space<vmem>>, vector<1x128xf32>
    %20 = vector.broadcast %19 : vector<1x128xf32> to vector<16x128xf32>
    %21 = arith.addf %18, %20 : vector<16x128xf32>
    %cst_17 = arith.constant 0.000000e+00 : f32
    %22 = vector.broadcast %cst_17 : f32 to vector<16x128xf32>
    %23 = arith.maximumf %21, %22 : vector<16x128xf32>
    %24 = arith.truncf %23 : vector<16x128xf32> to vector<16x128xbf16>
    %c0_18 = arith.constant 0 : index
    %c0_19 = arith.constant 0 : index
    %25 = vector.load %arg8[%c0_18, %c0_19] : memref<128x128xbf16, #tpu.memory_space<vmem>>, vector<128x128xbf16>
    %cst_20 = arith.constant dense<0.000000e+00> : vector<16x128xf32>
    %26 = tpu.matmul %24, %25, %cst_20 {dimension_numbers = #tpu.dot_dimension_numbers<[1], [0], [0], [1], [0, 0, 1, 1], [], []>} : vector<16x128xbf16>, vector<128x128xbf16>, vector<16x128xf32> -> vector<16x128xf32>
    %c0_21 = arith.constant 0 : index
    %c0_22 = arith.constant 0 : index
    %27 = vector.load %arg9[%c0_21, %c0_22] : memref<1x128xf32, #tpu.memory_space<vmem>>, vector<1x128xf32>
    %28 = vector.broadcast %27 : vector<1x128xf32> to vector<16x128xf32>
    %29 = arith.addf %26, %28 : vector<16x128xf32>
    %cst_23 = arith.constant 0.000000e+00 : f32
    %30 = vector.broadcast %cst_23 : f32 to vector<16x128xf32>
    %31 = arith.maximumf %29, %30 : vector<16x128xf32>
    %32 = arith.truncf %31 : vector<16x128xf32> to vector<16x128xbf16>
    %c0_24 = arith.constant 0 : index
    %c0_25 = arith.constant 0 : index
    %33 = vector.load %arg10[%c0_24, %c0_25] : memref<128x128xbf16, #tpu.memory_space<vmem>>, vector<128x128xbf16>
    %cst_26 = arith.constant dense<0.000000e+00> : vector<16x128xf32>
    %34 = tpu.matmul %32, %33, %cst_26 {dimension_numbers = #tpu.dot_dimension_numbers<[1], [0], [0], [1], [0, 0, 1, 1], [], []>} : vector<16x128xbf16>, vector<128x128xbf16>, vector<16x128xf32> -> vector<16x128xf32>
    %c0_27 = arith.constant 0 : index
    %c0_28 = arith.constant 0 : index
    %35 = vector.load %arg11[%c0_27, %c0_28] : memref<1x128xf32, #tpu.memory_space<vmem>>, vector<1x128xf32>
    %36 = vector.broadcast %35 : vector<1x128xf32> to vector<16x128xf32>
    %37 = arith.addf %34, %36 : vector<16x128xf32>
    %c0_29 = arith.constant 0 : index
    %c0_30 = arith.constant 0 : index
    %38 = vector.load %arg12[%c0_29, %c0_30] : memref<16x128xf32, #tpu.memory_space<vmem>>, vector<16x128xf32>
    tpu.vector_store %arg12[%c0_29, %c0_30], %37 {strides = array<i32>} : memref<16x128xf32, #tpu.memory_space<vmem>>, vector<16x128xf32>,
    return
  }
  func.func @transform_0(%arg0: i32) -> (i32, i32) {
    %c0_i32 = arith.constant 0 : i32
    %c0_i32_0 = arith.constant 0 : i32
    return %arg0, %c0_i32 : i32, i32
  }
  func.func @transform_1(%arg0: i32) -> (i32, i32) {
    %c0_i32 = arith.constant 0 : i32
    %c0_i32_0 = arith.constant 0 : i32
    %c0_i32_1 = arith.constant 0 : i32
    return %c0_i32, %c0_i32_0 : i32, i32
  }
  func.func @transform_2(%arg0: i32) -> (i32, i32) {
    %c0_i32 = arith.constant 0 : i32
    %c0_i32_0 = arith.constant 0 : i32
    %c0_i32_1 = arith.constant 0 : i32
    return %c0_i32, %c0_i32_0 : i32, i32
  }
  func.func @transform_3(%arg0: i32) -> (i32, i32) {
    %c0_i32 = arith.constant 0 : i32
    %c0_i32_0 = arith.constant 0 : i32
    %c0_i32_1 = arith.constant 0 : i32
    return %c0_i32, %c0_i32_0 : i32, i32
  }
  func.func @transform_4(%arg0: i32) -> (i32, i32) {
    %c0_i32 = arith.constant 0 : i32
    %c0_i32_0 = arith.constant 0 : i32
    %c0_i32_1 = arith.constant 0 : i32
    return %c0_i32, %c0_i32_0 : i32, i32
  }
  func.func @transform_5(%arg0: i32) -> (i32, i32) {
    %c0_i32 = arith.constant 0 : i32
    %c0_i32_0 = arith.constant 0 : i32
    %c0_i32_1 = arith.constant 0 : i32
    return %c0_i32, %c0_i32_0 : i32, i32
  }
  func.func @transform_6(%arg0: i32) -> (i32, i32) {
    %c0_i32 = arith.constant 0 : i32
    %c0_i32_0 = arith.constant 0 : i32
    %c0_i32_1 = arith.constant 0 : i32
    return %c0_i32, %c0_i32_0 : i32, i32
  }
  func.func @transform_7(%arg0: i32) -> (i32, i32) {
    %c0_i32 = arith.constant 0 : i32
    %c0_i32_0 = arith.constant 0 : i32
    %c0_i32_1 = arith.constant 0 : i32
    return %c0_i32, %c0_i32_0 : i32, i32
  }
  func.func @transform_8(%arg0: i32) -> (i32, i32) {
    %c0_i32 = arith.constant 0 : i32
    %c0_i32_0 = arith.constant 0 : i32
    %c0_i32_1 = arith.constant 0 : i32
    return %c0_i32, %c0_i32_0 : i32, i32
  }
  func.func @transform_9(%arg0: i32) -> (i32, i32) {
    %c0_i32 = arith.constant 0 : i32
    %c0_i32_0 = arith.constant 0 : i32
    %c0_i32_1 = arith.constant 0 : i32
    return %c0_i32, %c0_i32_0 : i32, i32
  }
  func.func @transform_10(%arg0: i32) -> (i32, i32) {
    %c0_i32 = arith.constant 0 : i32
    %c0_i32_0 = arith.constant 0 : i32
    %c0_i32_1 = arith.constant 0 : i32
    return %c0_i32, %c0_i32_0 : i32, i32
  }
  func.func @transform_11(%arg0: i32) -> (i32, i32) {
    %c0_i32 = arith.constant 0 : i32
    %c0_i32_0 = arith.constant 0 : i32
    return %arg0, %c0_i32 : i32, i32
  }
}

</mosaic_0001>

<llo_original>
// kernel: mlp_forward.1
$region0: #{mlp_forward.1}
  #allocation0 [shape = 'u32[]', space=smem, size = 0x4, offset = 0x4, fixed_abs, tag = 'smem constant byte address 0x4 - core index']
  #allocation1 [shape = 'u32[144,128]{1,0:T(1,128)}', space=vmem, size = 0x12000, scoped, tag = 'internal scratch']
  %s0 = inlined_call_operand.vmem [shape: bf16[16,128], index: 0, kind: input, shape index: {}]
  %s1 = inlined_call_operand.hbm [shape: bf16[128,128], index: 1, kind: input, shape index: {}]
  %s2 = inlined_call_operand.vmem [shape: f32[1,128], index: 2, kind: input, shape index: {}]
  %s3 = inlined_call_operand.hbm [shape: bf16[128,128], index: 3, kind: input, shape index: {}]
  %s4 = inlined_call_operand.vmem [shape: f32[1,128], index: 4, kind: input, shape index: {}]
  %s5 = inlined_call_operand.hbm [shape: bf16[128,128], index: 5, kind: input, shape index: {}]
  %s6 = inlined_call_operand.vmem [shape: f32[1,128], index: 6, kind: input, shape index: {}]
  %s7 = inlined_call_operand.hbm [shape: bf16[128,128], index: 7, kind: input, shape index: {}]
  %s8 = inlined_call_operand.vmem [shape: f32[1,128], index: 8, kind: input, shape index: {}]
  %s9 = inlined_call_operand.hbm [shape: bf16[128,128], index: 9, kind: input, shape index: {}]
  %s10 = inlined_call_operand.vmem [shape: f32[1,128], index: 10, kind: input, shape index: {}]
  %s11 = inlined_call_operand.vmem [shape: f32[16,128], index: 11, kind: output, shape index: {}]
  %s12 = sld [smem:[#allocation0]]
  $region74: #{mlp_forward.1} parent=0
    _
  %s14 = ssub.s32 1, %s12
  %s15 = scalar_select 0, %s14, %s12
  $region1: #{mlp_forward.1} parent=0
    #allocation2 [shape = 'u8[32768]{0}', space=vmem, size = 0x8000, scoped, tag = 'input window, operand 1, single buffered']
    #allocation3 [shape = 's32[1]{0}', space=sflag, size = 0x4, scoped, tag = 'scoped memory for mlp_forward.1']
    #allocation4 [shape = 'u8[32768]{0}', space=vmem, size = 0x8000, scoped, tag = 'input window, operand 3, single buffered']
    #allocation5 [shape = 's32[1]{0}', space=sflag, size = 0x4, scoped, tag = 'scoped memory for mlp_forward.1']
    #allocation6 [shape = 'u8[32768]{0}', space=vmem, size = 0x8000, scoped, tag = 'input window, operand 5, single buffered']
    #allocation7 [shape = 'u8[32768]{0}', space=vmem, size = 0x8000, scoped, tag = 'input window, operand 7, single buffered']
    #allocation8 [shape = 's32[1]{0}', space=sflag, size = 0x4, scoped, tag = 'scoped memory for mlp_forward.1']
    #allocation9 [shape = 'u8[32768]{0}', space=vmem, size = 0x8000, scoped, tag = 'input window, operand 9, single buffered']
    %16 = vsyncpa [#allocation3], 0
    %17 = vsyncpa [#allocation5], 0
    %18 = vsyncpa [#allocation8], 0
    // Predicated region
    $region2: #{mlp_forward.1} parent=1 // pred_check
      _
    $region3: #{mlp_forward.1} parent=1 // pred_check_branch
      %20 = sbr.rel (0) target = $region5
    $region4: #{mlp_forward.1} parent=1 // pred_region
      _
    $region5: #{mlp_forward.1} parent=1 // pred_fallthru
      _
    // Predicated region
    $region6: #{mlp_forward.1} parent=1 // pred_check
      _
    $region7: #{mlp_forward.1} parent=1 // pred_check_branch
      %22 = sbr.rel (0) target = $region9
    $region8: #{mlp_forward.1} parent=1 // pred_region
      %s24 = ssub.s32 1024, 1024
      %25 = vsyncadd [#allocation3], %s24
      %s26 = sshll.u32 [#allocation2], 4
      %s27 = int_to_ptr.vmem [resolvable:$true] %s26
      %32 = dma.hbm_to_vmem [thread:$0]  %s1, 1024, %s27, [#allocation3], 64, 64, 4
    $region9: #{mlp_forward.1} parent=1 // pred_fallthru
      _
    // Predicated region
    $region10: #{mlp_forward.1} parent=1 // pred_check
      _
    $region11: #{mlp_forward.1} parent=1 // pred_check_branch
      %34 = sbr.rel (0) target = $region13
    $region12: #{mlp_forward.1} parent=1 // pred_region
      _
    $region13: #{mlp_forward.1} parent=1 // pred_fallthru
      _
    // Predicated region
    $region14: #{mlp_forward.1} parent=1 // pred_check
      _
    $region15: #{mlp_forward.1} parent=1 // pred_check_branch
      %36 = sbr.rel (0) target = $region17
    $region16: #{mlp_forward.1} parent=1 // pred_region
      %s38 = ssub.s32 1024, 1024
      %39 = vsyncadd [#allocation5], %s38
      %s40 = sshll.u32 [#allocation4], 4
      %s41 = int_to_ptr.vmem [resolvable:$true] %s40
      %46 = dma.hbm_to_vmem [thread:$0]  %s3, 1024, %s41, [#allocation5], 64, 64, 4
    $region17: #{mlp_forward.1} parent=1 // pred_fallthru
      _
    // Predicated region
    $region18: #{mlp_forward.1} parent=1 // pred_check
      _
    $region19: #{mlp_forward.1} parent=1 // pred_check_branch
      %48 = sbr.rel (0) target = $region21
    $region20: #{mlp_forward.1} parent=1 // pred_region
      _
    $region21: #{mlp_forward.1} parent=1 // pred_fallthru
      _
    // Predicated region
    $region22: #{mlp_forward.1} parent=1 // pred_check
      _
    $region23: #{mlp_forward.1} parent=1 // pred_check_branch
      %50 = sbr.rel (0) target = $region25
    $region24: #{mlp_forward.1} parent=1 // pred_region
      %s52 = ssub.s32 1024, 1024
      %53 = vsyncadd [#allocation5], %s52
      %s54 = sshll.u32 [#allocation6], 4
      %s55 = int_to_ptr.vmem [resolvable:$true] %s54
      %60 = dma.hbm_to_vmem [thread:$0]  %s5, 1024, %s55, [#allocation5], 64, 64, 4
    $region25: #{mlp_forward.1} parent=1 // pred_fallthru
      _
    // Predicated region
    $region26: #{mlp_forward.1} parent=1 // pred_check
      _
    $region27: #{mlp_forward.1} parent=1 // pred_check_branch
      %62 = sbr.rel (0) target = $region29
    $region28: #{mlp_forward.1} parent=1 // pred_region
      _
    $region29: #{mlp_forward.1} parent=1 // pred_fallthru
      _
    // Predicated region
    $region30: #{mlp_forward.1} parent=1 // pred_check
      _
    $region31: #{mlp_forward.1} parent=1 // pred_check_branch
      %64 = sbr.rel (0) target = $region33
    $region32: #{mlp_forward.1} parent=1 // pred_region
      %s66 = ssub.s32 1024, 1024
      %67 = vsyncadd [#allocation8], %s66
      %s68 = sshll.u32 [#allocation7], 4
      %s69 = int_to_ptr.vmem [resolvable:$true] %s68
      %74 = dma.hbm_to_vmem [thread:$0]  %s7, 1024, %s69, [#allocation8], 64, 64, 4
    $region33: #{mlp_forward.1} parent=1 // pred_fallthru
      _
    // Predicated region
    $region34: #{mlp_forward.1} parent=1 // pred_check
      _
    $region35: #{mlp_forward.1} parent=1 // pred_check_branch
      %76 = sbr.rel (0) target = $region37
    $region36: #{mlp_forward.1} parent=1 // pred_region
      _
    $region37: #{mlp_forward.1} parent=1 // pred_fallthru
      _
    // Predicated region
    $region38: #{mlp_forward.1} parent=1 // pred_check
      _
    $region39: #{mlp_forward.1} parent=1 // pred_check_branch
      %78 = sbr.rel (0) target = $region41
    $region40: #{mlp_forward.1} parent=1 // pred_region
      %s80 = ssub.s32 1024, 1024
      %81 = vsyncadd [#allocation8], %s80
      %s82 = sshll.u32 [#allocation9], 4
      %s83 = int_to_ptr.vmem [resolvable:$true] %s82
      %88 = dma.hbm_to_vmem [thread:$0]  %s9, 1024, %s83, [#allocation8], 64, 64, 4
    $region41: #{mlp_forward.1} parent=1 // pred_fallthru
      _
    // Predicated region
    $region42: #{mlp_forward.1} parent=1 // pred_check
      _
    $region43: #{mlp_forward.1} parent=1 // pred_check_branch
      %90 = sbr.rel (0) target = $region45
    $region44: #{mlp_forward.1} parent=1 // pred_region
      _
    $region45: #{mlp_forward.1} parent=1 // pred_fallthru
      _
    // Predicated region
    $region46: #{mlp_forward.1} parent=1 // pred_check
      _
    $region47: #{mlp_forward.1} parent=1 // pred_check_branch
      %92 = sbr.rel (0) target = $region49
    $region48: #{mlp_forward.1} parent=1 // pred_region
      %93 = dma.done [#allocation3], 1024
    $region49: #{mlp_forward.1} parent=1 // pred_fallthru
      _
    // Predicated region
    $region50: #{mlp_forward.1} parent=1 // pred_check
      _
    $region51: #{mlp_forward.1} parent=1 // pred_check_branch
      %95 = sbr.rel (0) target = $region53
    $region52: #{mlp_forward.1} parent=1 // pred_region
      %96 = dma.done [#allocation5], 1024
    $region53: #{mlp_forward.1} parent=1 // pred_fallthru
      _
    // Predicated region
    $region54: #{mlp_forward.1} parent=1 // pred_check
      _
    $region55: #{mlp_forward.1} parent=1 // pred_check_branch
      %98 = sbr.rel (0) target = $region57
    $region56: #{mlp_forward.1} parent=1 // pred_region
      %99 = dma.done [#allocation5], 1024
    $region57: #{mlp_forward.1} parent=1 // pred_fallthru
      _
    // Predicated region
    $region58: #{mlp_forward.1} parent=1 // pred_check
      _
    $region59: #{mlp_forward.1} parent=1 // pred_check_branch
      %101 = sbr.rel (0) target = $region61
    $region60: #{mlp_forward.1} parent=1 // pred_region
      %102 = dma.done [#allocation8], 1024
    $region61: #{mlp_forward.1} parent=1 // pred_fallthru
      _
    // Predicated region
    $region62: #{mlp_forward.1} parent=1 // pred_check
      _
    $region63: #{mlp_forward.1} parent=1 // pred_check_branch
      %104 = sbr.rel (0) target = $region65
    $region64: #{mlp_forward.1} parent=1 // pred_region
      %105 = dma.done [#allocation8], 1024
    $region65: #{mlp_forward.1} parent=1 // pred_fallthru
      _
    %v107 = vld [vmem:[%s0] sm:$0xf]
    %v108 = vld [vmem:[%s0 + $0x4] sm:$0xf]
    %v109 = vld [vmem:[#allocation2] sm:$0xf]
    %v110 = vld [vmem:[#allocation2 + $0x4] sm:$0xf]
    %v111 = vld [vmem:[#allocation2 + $0x8] sm:$0xf]
    %v112 = vld [vmem:[#allocation2 + $0xc] sm:$0xf]
    %v113 = vld [vmem:[#allocation2 + $0x10] sm:$0xf]
    %v114 = vld [vmem:[#allocation2 + $0x14] sm:$0xf]
    %v115 = vld [vmem:[#allocation2 + $0x18] sm:$0xf]
    %v116 = vld [vmem:[#allocation2 + $0x1c] sm:$0xf]
    %v117 = vld [vmem:[#allocation2 + $0x20] sm:$0xf]
    %v118 = vld [vmem:[#allocation2 + $0x24] sm:$0xf]
    %v119 = vld [vmem:[#allocation2 + $0x28] sm:$0xf]
    %v120 = vld [vmem:[#allocation2 + $0x2c] sm:$0xf]
    %v121 = vld [vmem:[#allocation2 + $0x30] sm:$0xf]
    %v122 = vld [vmem:[#allocation2 + $0x34] sm:$0xf]
    %v123 = vld [vmem:[#allocation2 + $0x38] sm:$0xf]
    %v124 = vld [vmem:[#allocation2 + $0x3c] sm:$0xf]
    %v125 = vld [vmem:[%s2] sm:$0x1]
    %v127 = vlaneseq
    %v128 = vshrl.u32 %v127, 7
    %v129 = vsub.s32 0, %v128
    %v130 = vrot.slane %v125, %v129
    %v134 = vunpack.c.l.b16 %v107
    %v135 = vunpack.c.l.b16 %v108
    %v136 = vpack.c.b16 %v135, %v134
    %v154 = vunpack.c.l.b16 %v109
    %v155 = vunpack.c.l.b16 %v110
    %v156 = vunpack.c.l.b16 %v111
    %v157 = vunpack.c.l.b16 %v112
    %v158 = vunpack.c.l.b16 %v113
    %v159 = vunpack.c.l.b16 %v114
    %v160 = vunpack.c.l.b16 %v115
    %v161 = vunpack.c.l.b16 %v116
    %v162 = vunpack.c.l.b16 %v117
    %v163 = vunpack.c.l.b16 %v118
    %v164 = vunpack.c.l.b16 %v119
    %v165 = vunpack.c.l.b16 %v120
    %v166 = vunpack.c.l.b16 %v121
    %v167 = vunpack.c.l.b16 %v122
    %v168 = vunpack.c.l.b16 %v123
    %v169 = vunpack.c.l.b16 %v124
    %v170 = vpack.c.b16 %v155, %v154
    %v171 = vpack.c.b16 %v157, %v156
    %v172 = vpack.c.b16 %v159, %v158
    %v173 = vpack.c.b16 %v161, %v160
    %v174 = vpack.c.b16 %v163, %v162
    %v175 = vpack.c.b16 %v165, %v164
    %v176 = vpack.c.b16 %v167, %v166
    %v177 = vpack.c.b16 %v169, %v168
    %186 = vmatprep.subr.bf16.mxu0 0
    %187 = vmatpush1.bf16.msra.mxu0 %v177
    %188 = vmatprep.subr.bf16.mxu0 0
    %189 = vmatpush1.bf16.msra.mxu0 %v176
    %190 = vmatprep.subr.bf16.mxu0 0
    %191 = vmatpush1.bf16.msra.mxu0 %v175
    %192 = vmatprep.subr.bf16.mxu0 0
    %193 = vmatpush1.bf16.msra.mxu0 %v174
    %194 = vmatprep.subr.bf16.mxu0 0
    %195 = vmatpush1.bf16.msra.mxu0 %v173
    %196 = vmatprep.subr.bf16.mxu0 0
    %197 = vmatpush1.bf16.msra.mxu0 %v172
    %198 = vmatprep.subr.bf16.mxu0 0
    %199 = vmatpush1.bf16.msra.mxu0 %v171
    %200 = vmatprep.subr.bf16.mxu0 0
    %201 = vmatpush1.bf16.msra.mxu0 %v170
    %202 = vmatprep.subr.bf16.mxu0 0
    %203 = vmatpush2.bf16.msra.mxu0 0
    %204 = vmatprep.subr.bf16.mxu0 0
    %205 = vmatpush2.bf16.msra.mxu0 0
    %206 = vmatprep.subr.bf16.mxu0 0
    %207 = vmatpush2.bf16.msra.mxu0 0
    %208 = vmatprep.subr.bf16.mxu0 0
    %209 = vmatpush2.bf16.msra.mxu0 0
    %210 = vmatprep.subr.bf16.mxu0 0
    %211 = vmatpush2.bf16.msra.mxu0 0
    %212 = vmatprep.subr.bf16.mxu0 0
    %213 = vmatpush2.bf16.msra.mxu0 0
    %214 = vmatprep.subr.bf16.mxu0 0
    %215 = vmatpush2.bf16.msra.mxu0 0
    %216 = vmatprep.subr.bf16.mxu0 0
    %217 = vmatpush2.bf16.msra.mxu0 0
    %218 = vmatprep.mubr.bf16.mxu0 0
    %219 = vmatmul.mubr.bf16.gmra.mxu0 %v136
    %v220 = vpop.f32.mrf.mxu0
    %v221 = vadd.f32 %v130, %v220
    %v222 = vpop.f32.mrf.mxu0
    %v223 = vpop.f32.mrf.mxu0
    %v224 = vadd.f32 %v130, %v223
    %v225 = vpop.f32.mrf.mxu0
    %226 = vdwg.mxu0
    %v227 = vmax.f32 %v221, 0.0
    %v228 = vmax.f32 %v224, 0.0
    %v229 = vpack.c.bf16 %v228, %v227
    %v230 = vld [vmem:[#allocation4] sm:$0xf]
    %v231 = vld [vmem:[#allocation4 + $0x4] sm:$0xf]
    %v232 = vld [vmem:[#allocation4 + $0x8] sm:$0xf]
    %v233 = vld [vmem:[#allocation4 + $0xc] sm:$0xf]
    %v234 = vld [vmem:[#allocation4 + $0x10] sm:$0xf]
    %v235 = vld [vmem:[#allocation4 + $0x14] sm:$0xf]
    %v236 = vld [vmem:[#allocation4 + $0x18] sm:$0xf]
    %v237 = vld [vmem:[#allocation4 + $0x1c] sm:$0xf]
    %v238 = vld [vmem:[#allocation4 + $0x20] sm:$0xf]
    %v239 = vld [vmem:[#allocation4 + $0x24] sm:$0xf]
    %v240 = vld [vmem:[#allocation4 + $0x28] sm:$0xf]
    %v241 = vld [vmem:[#allocation4 + $0x2c] sm:$0xf]
    %v242 = vld [vmem:[#allocation4 + $0x30] sm:$0xf]
    %v243 = vld [vmem:[#allocation4 + $0x34] sm:$0xf]
    %v244 = vld [vmem:[#allocation4 + $0x38] sm:$0xf]
    %v245 = vld [vmem:[#allocation4 + $0x3c] sm:$0xf]
    %v246 = vld [vmem:[%s4] sm:$0x1]
    %v248 = vlaneseq
    %v249 = vshrl.u32 %v248, 7
    %v250 = vsub.s32 0, %v249
    %v251 = vrot.slane %v246, %v250
    %v269 = vunpack.c.l.b16 %v230
    %v270 = vunpack.c.l.b16 %v231
    %v271 = vunpack.c.l.b16 %v232
    %v272 = vunpack.c.l.b16 %v233
    %v273 = vunpack.c.l.b16 %v234
    %v274 = vunpack.c.l.b16 %v235
    %v275 = vunpack.c.l.b16 %v236
    %v276 = vunpack.c.l.b16 %v237
    %v277 = vunpack.c.l.b16 %v238
    %v278 = vunpack.c.l.b16 %v239
    %v279 = vunpack.c.l.b16 %v240
    %v280 = vunpack.c.l.b16 %v241
    %v281 = vunpack.c.l.b16 %v242
    %v282 = vunpack.c.l.b16 %v243
    %v283 = vunpack.c.l.b16 %v244
    %v284 = vunpack.c.l.b16 %v245
    %v285 = vpack.c.b16 %v270, %v269
    %v286 = vpack.c.b16 %v272, %v271
    %v287 = vpack.c.b16 %v274, %v273
    %v288 = vpack.c.b16 %v276, %v275
    %v289 = vpack.c.b16 %v278, %v277
    %v290 = vpack.c.b16 %v280, %v279
    %v291 = vpack.c.b16 %v282, %v281
    %v292 = vpack.c.b16 %v284, %v283
    %301 = vmatprep.subr.bf16.mxu0 0
    %302 = vmatpush1.bf16.msra.mxu0 %v292
    %303 = vmatprep.subr.bf16.mxu0 0
    %304 = vmatpush1.bf16.msra.mxu0 %v291
    %305 = vmatprep.subr.bf16.mxu0 0
    %306 = vmatpush1.bf16.msra.mxu0 %v290
    %307 = vmatprep.subr.bf16.mxu0 0
    %308 = vmatpush1.bf16.msra.mxu0 %v289
    %309 = vmatprep.subr.bf16.mxu0 0
    %310 = vmatpush1.bf16.msra.mxu0 %v288
    %311 = vmatprep.subr.bf16.mxu0 0
    %312 = vmatpush1.bf16.msra.mxu0 %v287
    %313 = vmatprep.subr.bf16.mxu0 0
    %314 = vmatpush1.bf16.msra.mxu0 %v286
    %315 = vmatprep.subr.bf16.mxu0 0
    %316 = vmatpush1.bf16.msra.mxu0 %v285
    %317 = vmatprep.subr.bf16.mxu0 0
    %318 = vmatpush2.bf16.msra.mxu0 0
    %319 = vmatprep.subr.bf16.mxu0 0
    %320 = vmatpush2.bf16.msra.mxu0 0
    %321 = vmatprep.subr.bf16.mxu0 0
    %322 = vmatpush2.bf16.msra.mxu0 0
    %323 = vmatprep.subr.bf16.mxu0 0
    %324 = vmatpush2.bf16.msra.mxu0 0
    %325 = vmatprep.subr.bf16.mxu0 0
    %326 = vmatpush2.bf16.msra.mxu0 0
    %327 = vmatprep.subr.bf16.mxu0 0
    %328 = vmatpush2.bf16.msra.mxu0 0
    %329 = vmatprep.subr.bf16.mxu0 0
    %330 = vmatpush2.bf16.msra.mxu0 0
    %331 = vmatprep.subr.bf16.mxu0 0
    %332 = vmatpush2.bf16.msra.mxu0 0
    %333 = vmatprep.mubr.bf16.mxu0 0
    %334 = vmatmul.mubr.bf16.gmra.mxu0 %v229
    %v335 = vpop.f32.mrf.mxu0
    %v336 = vadd.f32 %v251, %v335
    %v337 = vpop.f32.mrf.mxu0
    %v338 = vpop.f32.mrf.mxu0
    %v339 = vadd.f32 %v251, %v338
    %v340 = vpop.f32.mrf.mxu0
    %341 = vdwg.mxu0
    %v342 = vmax.f32 %v336, 0.0
    %v343 = vmax.f32 %v339, 0.0
    %v344 = vpack.c.bf16 %v343, %v342
    %v345 = vld [vmem:[#allocation6] sm:$0xf]
    %v346 = vld [vmem:[#allocation6 + $0x4] sm:$0xf]
    %v347 = vld [vmem:[#allocation6 + $0x8] sm:$0xf]
    %v348 = vld [vmem:[#allocation6 + $0xc] sm:$0xf]
    %v349 = vld [vmem:[#allocation6 + $0x10] sm:$0xf]
    %v350 = vld [vmem:[#allocation6 + $0x14] sm:$0xf]
    %v351 = vld [vmem:[#allocation6 + $0x18] sm:$0xf]
    %v352 = vld [vmem:[#allocation6 + $0x1c] sm:$0xf]
    %v353 = vld [vmem:[#allocation6 + $0x20] sm:$0xf]
    %v354 = vld [vmem:[#allocation6 + $0x24] sm:$0xf]
    %v355 = vld [vmem:[#allocation6 + $0x28] sm:$0xf]
    %v356 = vld [vmem:[#allocation6 + $0x2c] sm:$0xf]
    %v357 = vld [vmem:[#allocation6 + $0x30] sm:$0xf]
    %v358 = vld [vmem:[#allocation6 + $0x34] sm:$0xf]
    %v359 = vld [vmem:[#allocation6 + $0x38] sm:$0xf]
    %v360 = vld [vmem:[#allocation6 + $0x3c] sm:$0xf]
    %v361 = vld [vmem:[%s6] sm:$0x1]
    %v363 = vlaneseq
    %v364 = vshrl.u32 %v363, 7
    %v365 = vsub.s32 0, %v364
    %v366 = vrot.slane %v361, %v365
    %v384 = vunpack.c.l.b16 %v345
    %v385 = vunpack.c.l.b16 %v346
    %v386 = vunpack.c.l.b16 %v347
    %v387 = vunpack.c.l.b16 %v348
    %v388 = vunpack.c.l.b16 %v349
    %v389 = vunpack.c.l.b16 %v350
    %v390 = vunpack.c.l.b16 %v351
    %v391 = vunpack.c.l.b16 %v352
    %v392 = vunpack.c.l.b16 %v353
    %v393 = vunpack.c.l.b16 %v354
    %v394 = vunpack.c.l.b16 %v355
    %v395 = vunpack.c.l.b16 %v356
    %v396 = vunpack.c.l.b16 %v357
    %v397 = vunpack.c.l.b16 %v358
    %v398 = vunpack.c.l.b16 %v359
    %v399 = vunpack.c.l.b16 %v360
    %v400 = vpack.c.b16 %v385, %v384
    %v401 = vpack.c.b16 %v387, %v386
    %v402 = vpack.c.b16 %v389, %v388
    %v403 = vpack.c.b16 %v391, %v390
    %v404 = vpack.c.b16 %v393, %v392
    %v405 = vpack.c.b16 %v395, %v394
    %v406 = vpack.c.b16 %v397, %v396
    %v407 = vpack.c.b16 %v399, %v398
    %416 = vmatprep.subr.bf16.mxu0 0
    %417 = vmatpush1.bf16.msra.mxu0 %v407
    %418 = vmatprep.subr.bf16.mxu0 0
    %419 = vmatpush1.bf16.msra.mxu0 %v406
    %420 = vmatprep.subr.bf16.mxu0 0
    %421 = vmatpush1.bf16.msra.mxu0 %v405
    %422 = vmatprep.subr.bf16.mxu0 0
    %423 = vmatpush1.bf16.msra.mxu0 %v404
    %424 = vmatprep.subr.bf16.mxu0 0
    %425 = vmatpush1.bf16.msra.mxu0 %v403
    %426 = vmatprep.subr.bf16.mxu0 0
    %427 = vmatpush1.bf16.msra.mxu0 %v402
    %428 = vmatprep.subr.bf16.mxu0 0
    %429 = vmatpush1.bf16.msra.mxu0 %v401
    %430 = vmatprep.subr.bf16.mxu0 0
    %431 = vmatpush1.bf16.msra.mxu0 %v400
    %432 = vmatprep.subr.bf16.mxu0 0
    %433 = vmatpush2.bf16.msra.mxu0 0
    %434 = vmatprep.subr.bf16.mxu0 0
    %435 = vmatpush2.bf16.msra.mxu0 0
    %436 = vmatprep.subr.bf16.mxu0 0
    %437 = vmatpush2.bf16.msra.mxu0 0
    %438 = vmatprep.subr.bf16.mxu0 0
    %439 = vmatpush2.bf16.msra.mxu0 0
    %440 = vmatprep.subr.bf16.mxu0 0
    %441 = vmatpush2.bf16.msra.mxu0 0
    %442 = vmatprep.subr.bf16.mxu0 0
    %443 = vmatpush2.bf16.msra.mxu0 0
    %444 = vmatprep.subr.bf16.mxu0 0
    %445 = vmatpush2.bf16.msra.mxu0 0
    %446 = vmatprep.subr.bf16.mxu0 0
    %447 = vmatpush2.bf16.msra.mxu0 0
    %448 = vmatprep.mubr.bf16.mxu0 0
    %449 = vmatmul.mubr.bf16.gmra.mxu0 %v344
    %v450 = vpop.f32.mrf.mxu0
    %v451 = vadd.f32 %v366, %v450
    %v452 = vpop.f32.mrf.mxu0
    %v453 = vpop.f32.mrf.mxu0
    %v454 = vadd.f32 %v366, %v453
    %v455 = vpop.f32.mrf.mxu0
    %456 = vdwg.mxu0
    %v457 = vmax.f32 %v451, 0.0
    %v458 = vmax.f32 %v454, 0.0
    %v459 = vpack.c.bf16 %v458, %v457
    %v460 = vld [vmem:[#allocation7] sm:$0xf]
    %v461 = vld [vmem:[#allocation7 + $0x4] sm:$0xf]
    %v462 = vld [vmem:[#allocation7 + $0x8] sm:$0xf]
    %v463 = vld [vmem:[#allocation7 + $0xc] sm:$0xf]
    %v464 = vld [vmem:[#allocation7 + $0x10] sm:$0xf]
    %v465 = vld [vmem:[#allocation7 + $0x14] sm:$0xf]
    %v466 = vld [vmem:[#allocation7 + $0x18] sm:$0xf]
    %v467 = vld [vmem:[#allocation7 + $0x1c] sm:$0xf]
    %v468 = vld [vmem:[#allocation7 + $0x20] sm:$0xf]
    %v469 = vld [vmem:[#allocation7 + $0x24] sm:$0xf]
    %v470 = vld [vmem:[#allocation7 + $0x28] sm:$0xf]
    %v471 = vld [vmem:[#allocation7 + $0x2c] sm:$0xf]
    %v472 = vld [vmem:[#allocation7 + $0x30] sm:$0xf]
    %v473 = vld [vmem:[#allocation7 + $0x34] sm:$0xf]
    %v474 = vld [vmem:[#allocation7 + $0x38] sm:$0xf]
    %v475 = vld [vmem:[#allocation7 + $0x3c] sm:$0xf]
    %v476 = vld [vmem:[%s8] sm:$0x1]
    %v478 = vlaneseq
    %v479 = vshrl.u32 %v478, 7
    %v480 = vsub.s32 0, %v479
    %v481 = vrot.slane %v476, %v480
    %v499 = vunpack.c.l.b16 %v460
    %v500 = vunpack.c.l.b16 %v461
    %v501 = vunpack.c.l.b16 %v462
    %v502 = vunpack.c.l.b16 %v463
    %v503 = vunpack.c.l.b16 %v464
    %v504 = vunpack.c.l.b16 %v465
    %v505 = vunpack.c.l.b16 %v466
    %v506 = vunpack.c.l.b16 %v467
    %v507 = vunpack.c.l.b16 %v468
    %v508 = vunpack.c.l.b16 %v469
    %v509 = vunpack.c.l.b16 %v470
    %v510 = vunpack.c.l.b16 %v471
    %v511 = vunpack.c.l.b16 %v472
    %v512 = vunpack.c.l.b16 %v473
    %v513 = vunpack.c.l.b16 %v474
    %v514 = vunpack.c.l.b16 %v475
    %v515 = vpack.c.b16 %v500, %v499
    %v516 = vpack.c.b16 %v502, %v501
    %v517 = vpack.c.b16 %v504, %v503
    %v518 = vpack.c.b16 %v506, %v505
    %v519 = vpack.c.b16 %v508, %v507
    %v520 = vpack.c.b16 %v510, %v509
    %v521 = vpack.c.b16 %v512, %v511
    %v522 = vpack.c.b16 %v514, %v513
    %531 = vmatprep.subr.bf16.mxu0 0
    %532 = vmatpush1.bf16.msra.mxu0 %v522
    %533 = vmatprep.subr.bf16.mxu0 0
    %534 = vmatpush1.bf16.msra.mxu0 %v521
    %535 = vmatprep.subr.bf16.mxu0 0
    %536 = vmatpush1.bf16.msra.mxu0 %v520
    %537 = vmatprep.subr.bf16.mxu0 0
    %538 = vmatpush1.bf16.msra.mxu0 %v519
    %539 = vmatprep.subr.bf16.mxu0 0
    %540 = vmatpush1.bf16.msra.mxu0 %v518
    %541 = vmatprep.subr.bf16.mxu0 0
    %542 = vmatpush1.bf16.msra.mxu0 %v517
    %543 = vmatprep.subr.bf16.mxu0 0
    %544 = vmatpush1.bf16.msra.mxu0 %v516
    %545 = vmatprep.subr.bf16.mxu0 0
    %546 = vmatpush1.bf16.msra.mxu0 %v515
    %547 = vmatprep.subr.bf16.mxu0 0
    %548 = vmatpush2.bf16.msra.mxu0 0
    %549 = vmatprep.subr.bf16.mxu0 0
    %550 = vmatpush2.bf16.msra.mxu0 0
    %551 = vmatprep.subr.bf16.mxu0 0
    %552 = vmatpush2.bf16.msra.mxu0 0
    %553 = vmatprep.subr.bf16.mxu0 0
    %554 = vmatpush2.bf16.msra.mxu0 0
    %555 = vmatprep.subr.bf16.mxu0 0
    %556 = vmatpush2.bf16.msra.mxu0 0
    %557 = vmatprep.subr.bf16.mxu0 0
    %558 = vmatpush2.bf16.msra.mxu0 0
    %559 = vmatprep.subr.bf16.mxu0 0
    %560 = vmatpush2.bf16.msra.mxu0 0
    %561 = vmatprep.subr.bf16.mxu0 0
    %562 = vmatpush2.bf16.msra.mxu0 0
    %563 = vmatprep.mubr.bf16.mxu0 0
    %564 = vmatmul.mubr.bf16.gmra.mxu0 %v459
    %v565 = vpop.f32.mrf.mxu0
    %v566 = vadd.f32 %v481, %v565
    %v567 = vpop.f32.mrf.mxu0
    %v568 = vpop.f32.mrf.mxu0
    %v569 = vadd.f32 %v481, %v568
    %v570 = vpop.f32.mrf.mxu0
    %571 = vdwg.mxu0
    %v572 = vmax.f32 %v566, 0.0
    %v573 = vmax.f32 %v569, 0.0
    %v574 = vpack.c.bf16 %v573, %v572
    %v575 = vld [vmem:[#allocation9] sm:$0xf]
    %v576 = vld [vmem:[#allocation9 + $0x4] sm:$0xf]
    %v577 = vld [vmem:[#allocation9 + $0x8] sm:$0xf]
    %v578 = vld [vmem:[#allocation9 + $0xc] sm:$0xf]
    %v579 = vld [vmem:[#allocation9 + $0x10] sm:$0xf]
    %v580 = vld [vmem:[#allocation9 + $0x14] sm:$0xf]
    %v581 = vld [vmem:[#allocation9 + $0x18] sm:$0xf]
    %v582 = vld [vmem:[#allocation9 + $0x1c] sm:$0xf]
    %v583 = vld [vmem:[#allocation9 + $0x20] sm:$0xf]
    %v584 = vld [vmem:[#allocation9 + $0x24] sm:$0xf]
    %v585 = vld [vmem:[#allocation9 + $0x28] sm:$0xf]
    %v586 = vld [vmem:[#allocation9 + $0x2c] sm:$0xf]
    %v587 = vld [vmem:[#allocation9 + $0x30] sm:$0xf]
    %v588 = vld [vmem:[#allocation9 + $0x34] sm:$0xf]
    %v589 = vld [vmem:[#allocation9 + $0x38] sm:$0xf]
    %v590 = vld [vmem:[#allocation9 + $0x3c] sm:$0xf]
    %v591 = vld [vmem:[%s10] sm:$0x1]
    %v593 = vlaneseq
    %v594 = vshrl.u32 %v593, 7
    %v595 = vsub.s32 0, %v594
    %v596 = vrot.slane %v591, %v595
    %v614 = vunpack.c.l.b16 %v575
    %v615 = vunpack.c.l.b16 %v576
    %v616 = vunpack.c.l.b16 %v577
    %v617 = vunpack.c.l.b16 %v578
    %v618 = vunpack.c.l.b16 %v579
    %v619 = vunpack.c.l.b16 %v580
    %v620 = vunpack.c.l.b16 %v581
    %v621 = vunpack.c.l.b16 %v582
    %v622 = vunpack.c.l.b16 %v583
    %v623 = vunpack.c.l.b16 %v584
    %v624 = vunpack.c.l.b16 %v585
    %v625 = vunpack.c.l.b16 %v586
    %v626 = vunpack.c.l.b16 %v587
    %v627 = vunpack.c.l.b16 %v588
    %v628 = vunpack.c.l.b16 %v589
    %v629 = vunpack.c.l.b16 %v590
    %v630 = vpack.c.b16 %v615, %v614
    %v631 = vpack.c.b16 %v617, %v616
    %v632 = vpack.c.b16 %v619, %v618
    %v633 = vpack.c.b16 %v621, %v620
    %v634 = vpack.c.b16 %v623, %v622
    %v635 = vpack.c.b16 %v625, %v624
    %v636 = vpack.c.b16 %v627, %v626
    %v637 = vpack.c.b16 %v629, %v628
    %646 = vmatprep.subr.bf16.mxu0 0
    %647 = vmatpush1.bf16.msra.mxu0 %v637
    %648 = vmatprep.subr.bf16.mxu0 0
    %649 = vmatpush1.bf16.msra.mxu0 %v636
    %650 = vmatprep.subr.bf16.mxu0 0
    %651 = vmatpush1.bf16.msra.mxu0 %v635
    %652 = vmatprep.subr.bf16.mxu0 0
    %653 = vmatpush1.bf16.msra.mxu0 %v634
    %654 = vmatprep.subr.bf16.mxu0 0
    %655 = vmatpush1.bf16.msra.mxu0 %v633
    %656 = vmatprep.subr.bf16.mxu0 0
    %657 = vmatpush1.bf16.msra.mxu0 %v632
    %658 = vmatprep.subr.bf16.mxu0 0
    %659 = vmatpush1.bf16.msra.mxu0 %v631
    %660 = vmatprep.subr.bf16.mxu0 0
    %661 = vmatpush1.bf16.msra.mxu0 %v630
    %662 = vmatprep.subr.bf16.mxu0 0
    %663 = vmatpush2.bf16.msra.mxu0 0
    %664 = vmatprep.subr.bf16.mxu0 0
    %665 = vmatpush2.bf16.msra.mxu0 0
    %666 = vmatprep.subr.bf16.mxu0 0
    %667 = vmatpush2.bf16.msra.mxu0 0
    %668 = vmatprep.subr.bf16.mxu0 0
    %669 = vmatpush2.bf16.msra.mxu0 0
    %670 = vmatprep.subr.bf16.mxu0 0
    %671 = vmatpush2.bf16.msra.mxu0 0
    %672 = vmatprep.subr.bf16.mxu0 0
    %673 = vmatpush2.bf16.msra.mxu0 0
    %674 = vmatprep.subr.bf16.mxu0 0
    %675 = vmatpush2.bf16.msra.mxu0 0
    %676 = vmatprep.subr.bf16.mxu0 0
    %677 = vmatpush2.bf16.msra.mxu0 0
    %678 = vmatprep.mubr.bf16.mxu0 0
    %679 = vmatmul.mubr.bf16.gmra.mxu0 %v574
    %v680 = vpop.f32.mrf.mxu0
    %v681 = vadd.f32 %v596, %v680
    %v682 = vpop.f32.mrf.mxu0
    %v683 = vpop.f32.mrf.mxu0
    %v684 = vadd.f32 %v596, %v683
    %v685 = vpop.f32.mrf.mxu0
    %686 = vdwg.mxu0
    %687 = vst [vmem:[%s11] sm:$0xff] %v681
    %688 = vst [vmem:[%s11 + $0x8] sm:$0xff] %v684
    // Predicated region
    $region66: #{mlp_forward.1} parent=1 // pred_check
      _
    $region67: #{mlp_forward.1} parent=1 // pred_check_branch
      %690 = sbr.rel (0) target = $region69
    $region68: #{mlp_forward.1} parent=1 // pred_region
      _
    $region69: #{mlp_forward.1} parent=1 // pred_fallthru
      _
    // Predicated region
    $region70: #{mlp_forward.1} parent=1 // pred_check
      _
    $region71: #{mlp_forward.1} parent=1 // pred_check_branch
      %692 = sbr.rel (0) target = $region73
    $region72: #{mlp_forward.1} parent=1 // pred_region
      _
    $region73: #{mlp_forward.1} parent=1 // pred_fallthru
      _
    %693 = vsyncpa [#allocation3], 1
    %694 = vsyncpa [#allocation5], 1
    %695 = vsyncpa [#allocation8], 1

</llo_original>
